<compile_context>
chip_gen: v7x
topology: tpu7x:2x2x1
jax: 0.10.0
libtpu: 0.0.40
codegen_flags: <defaults>
</compile_context>

<pallas_src>
import math

import jax
import jax.numpy as jnp
from jax.experimental import pallas as pl
from jax.experimental.pallas import tpu as pltpu

IN_DIM = 112       # real input features (from CriticModel(112)) -- not padded
HID = 128
N_ACTIONS = 8
HEAD_OUT = 128     # fused head: cols 0..7 = policy logits, col 8 = value, rest 0
MAX_TB = 1024      # max batch tile (multiple of 8)


def critic_kernel(x_ref, w1_ref, b1_ref, w2_ref, b2_ref, wh_ref, bh_ref,
                  v_ref, p_ref):
    # bf16 matmul operands, f32 accumulation.
    x = x_ref[...].astype(jnp.bfloat16)                                 # (TB, 112)

    h1 = jnp.dot(x, w1_ref[...], preferred_element_type=jnp.float32) + b1_ref[...]
    h1 = jnp.maximum(h1, 0.0)                                           # (TB, 128) f32

    h2 = jnp.dot(h1.astype(jnp.bfloat16), w2_ref[...],
                 preferred_element_type=jnp.float32) + b2_ref[...]
    h2 = jnp.maximum(h2, 0.0)                                           # (TB, 128) f32

    # Fused value+policy head: one lane-dense (HID, 128) matmul.
    head = jnp.dot(h2.astype(jnp.bfloat16), wh_ref[...],
                   preferred_element_type=jnp.float32) + bh_ref[...]    # (TB, 128)

    # Value lives in column N_ACTIONS.
    v_ref[...] = head[:, N_ACTIONS:N_ACTIONS + 1]                       # (TB, 1)

    # Softmax over the 8 real policy columns only.  Slicing before the
    # reduction means no masking / iota is needed and exp runs on 8 lanes.
    logits = head[:, :N_ACTIONS]                                        # (TB, 8)
    m = jnp.max(logits, axis=-1, keepdims=True)
    e = jnp.exp(logits - m)
    denom = jnp.sum(e, axis=-1, keepdims=True)
    p_ref[...] = e / denom                                              # exact divide


def r_critic_sumo_forward(x, kernel_params):
    """x: (B, 112).  Returns (v: (B, 1) f32, p: (B, N_ACTIONS) f32)."""
    w1, b1, w2, b2, wh, bh = kernel_params
    x = x.astype(jnp.float32)          # matches module's .to(torch.float32)
    B = x.shape[0]

    # Tile selection: keep padding waste < 8 rows; >= 2 grid steps when B is
    # large enough so v7x's 2 TCs both get work and the pipeline overlaps.
    n_steps = pl.cdiv(B, MAX_TB)
    if B >= 16:
        n_steps = max(n_steps, 2)
    TB = ((pl.cdiv(B, n_steps) + 7) // 8) * 8
    grid = (pl.cdiv(B, TB),)

    rep = lambda i: (0, 0)  # replicated weights / biases

    v, p = pl.pallas_call(
        critic_kernel,
        out_shape=(
            jax.ShapeDtypeStruct((B, 1), jnp.float32),
            jax.ShapeDtypeStruct((B, N_ACTIONS), jnp.float32),
        ),
        grid_spec=pltpu.PrefetchScalarGridSpec(
            num_scalar_prefetch=0,
            grid=grid,
            in_specs=[
                pl.BlockSpec((TB, IN_DIM), lambda i: (i, 0)),   # x (no padding)
                pl.BlockSpec((IN_DIM, HID), rep),               # w1 (bf16)
                pl.BlockSpec((1, HID), rep),                    # b1 (f32)
                pl.BlockSpec((HID, HID), rep),                  # w2 (bf16)
                pl.BlockSpec((1, HID), rep),                    # b2 (f32)
                pl.BlockSpec((HID, HEAD_OUT), rep),             # fused head W (bf16)
                pl.BlockSpec((1, HEAD_OUT), rep),               # fused head b (f32)
            ],
            out_specs=(
                pl.BlockSpec((TB, 1), lambda i: (i, 0)),            # v
                pl.BlockSpec((TB, N_ACTIONS), lambda i: (i, 0)),    # p
            ),
        ),
        compiler_params=pltpu.CompilerParams(
            dimension_semantics=("parallel",)),
    )(x, w1, b1, w2, b2, wh, bh)
    return v, p


def init_raw_params(key):
    """Deterministic parameter init (uniform ~ PyTorch Linear default scale)."""
    ks = jax.random.split(key, 8)

    def lin(kw, kb, fan_in, fan_out):
        bound = 1.0 / math.sqrt(fan_in)
        w = jax.random.uniform(kw, (fan_in, fan_out), jnp.float32, -bound, bound)
        b = jax.random.uniform(kb, (1, fan_out), jnp.float32, -bound, bound)
        return w, b

    w1, b1 = lin(ks[0], ks[1], IN_DIM, HID)
    w2, b2 = lin(ks[2], ks[3], HID, HID)
    wv, bv = lin(ks[4], ks[5], HID, 1)
    wp, bp = lin(ks[6], ks[7], HID, N_ACTIONS)
    return (w1, b1, w2, b2, wv, bv, wp, bp)


def prepare_kernel_params(raw):
    """Fuse value+policy heads into one lane-dense head; store matmul weights bf16."""
    w1, b1, w2, b2, wv, bv, wp, bp = raw
    wh = jnp.zeros((HID, HEAD_OUT), jnp.float32)
    wh = wh.at[:, :N_ACTIONS].set(wp).at[:, N_ACTIONS:N_ACTIONS + 1].set(wv)
    bh = jnp.zeros((1, HEAD_OUT), jnp.float32)
    bh = bh.at[:, :N_ACTIONS].set(bp).at[:, N_ACTIONS:N_ACTIONS + 1].set(bv)
    return (w1.astype(jnp.bfloat16), b1,
            w2.astype(jnp.bfloat16), b2,
            wh.astype(jnp.bfloat16), bh)


def reference_forward(x, raw):
    """Pure-JAX f32 reference (matches the assumed PyTorch CriticModel)."""
    w1, b1, w2, b2, wv, bv, wp, bp = raw
    h1 = jnp.maximum(x @ w1 + b1, 0.0)
    h2 = jnp.maximum(h1 @ w2 + b2, 0.0)
    v = h2 @ wv + bv
    logits = h2 @ wp + bp
    p = jax.nn.softmax(logits, axis=-1)
    return v, p


if __name__ == "__main__":
    key = jax.random.PRNGKey(0)
    k_x, k_p = jax.random.split(key)

    B = 8
    x = jax.random.normal(k_x, (B, IN_DIM), dtype=jnp.float32)
    raw = init_raw_params(k_p)
    params = prepare_kernel_params(raw)

    v, p = r_critic_sumo_forward(x, params)
    jax.block_until_ready((v, p))

    assert v.shape == (B, 1) and v.dtype == jnp.float32
    assert p.shape == (B, N_ACTIONS) and p.dtype == jnp.float32
    # softmax rows sum to 1 (exact divide)
    assert bool(jnp.all(jnp.abs(jnp.sum(p, axis=-1) - 1.0) < 1e-4))

    # compare against pure-JAX f32 reference (kernel uses bf16 matmul operands,
    # f32 accumulation -> loose-but-meaningful tolerances)
    v_ref, p_ref = reference_forward(x, raw)
    assert bool(jnp.all(jnp.abs(v - v_ref) < 2e-2))
    assert bool(jnp.all(jnp.abs(p - p_ref) < 5e-3))

    print("KERNEL_OK")
</pallas_src>

<mosaic_0001>
module attributes {stable_mosaic.version = 11 : i64} {
  func.func @critic_kernel(%arg0: i32, %arg1: memref<8x112xf32, #tpu.memory_space<vmem>>, %arg2: memref<112x128xbf16, #tpu.memory_space<vmem>>, %arg3: memref<1x128xf32, #tpu.memory_space<vmem>>, %arg4: memref<128x128xbf16, #tpu.memory_space<vmem>>, %arg5: memref<1x128xf32, #tpu.memory_space<vmem>>, %arg6: memref<128x128xbf16, #tpu.memory_space<vmem>>, %arg7: memref<1x128xf32, #tpu.memory_space<vmem>>, %arg8: memref<8x1xf32, #tpu.memory_space<vmem>>, %arg9: memref<8x8xf32, #tpu.memory_space<vmem>>) attributes {dimension_semantics = [#tpu.dimension_semantics<parallel>], iteration_bounds = array<i64: 1>, scalar_prefetch = 0 : i64, scratch_operands = 0 : i64, tpu.core_type = #tpu.core_type<tc>, window_params = [{transform_indices = @transform_0, window_bounds = array<i64: 8, 112>}, {pipeline_mode = #tpu.pipeline_mode<synchronous>, transform_indices = @transform_1, window_bounds = array<i64: 112, 128>}, {pipeline_mode = #tpu.pipeline_mode<synchronous>, transform_indices = @transform_2, window_bounds = array<i64: 1, 128>}, {pipeline_mode = #tpu.pipeline_mode<synchronous>, transform_indices = @transform_3, window_bounds = array<i64: 128, 128>}, {pipeline_mode = #tpu.pipeline_mode<synchronous>, transform_indices = @transform_4, window_bounds = array<i64: 1, 128>}, {pipeline_mode = #tpu.pipeline_mode<synchronous>, transform_indices = @transform_5, window_bounds = array<i64: 128, 128>}, {pipeline_mode = #tpu.pipeline_mode<synchronous>, transform_indices = @transform_6, window_bounds = array<i64: 1, 128>}, {transform_indices = @transform_7, window_bounds = array<i64: 8, 1>}, {transform_indices = @transform_8, window_bounds = array<i64: 8, 8>}]} {
    %c0 = arith.constant 0 : index
    %c0_0 = arith.constant 0 : index
    %0 = vector.load %arg1[%c0, %c0_0] : memref<8x112xf32, #tpu.memory_space<vmem>>, vector<8x112xf32>
    %1 = arith.truncf %0 : vector<8x112xf32> to vector<8x112xbf16>
    %c0_1 = arith.constant 0 : index
    %c0_2 = arith.constant 0 : index
    %2 = vector.load %arg2[%c0_1, %c0_2] : memref<112x128xbf16, #tpu.memory_space<vmem>>, vector<112x128xbf16>
    %cst = arith.constant dense<0.000000e+00> : vector<8x128xf32>
    %3 = tpu.matmul %1, %2, %cst {dimension_numbers = #tpu.dot_dimension_numbers<[1], [0], [0], [1], [0, 0, 1, 1], [], []>} : vector<8x112xbf16>, vector<112x128xbf16>, vector<8x128xf32> -> vector<8x128xf32>
    %c0_3 = arith.constant 0 : index
    %c0_4 = arith.constant 0 : index
    %4 = vector.load %arg3[%c0_3, %c0_4] : memref<1x128xf32, #tpu.memory_space<vmem>>, vector<1x128xf32>
    %5 = vector.broadcast %4 : vector<1x128xf32> to vector<8x128xf32>
    %6 = arith.addf %3, %5 : vector<8x128xf32>
    %cst_5 = arith.constant 0.000000e+00 : f32
    %7 = vector.broadcast %cst_5 : f32 to vector<8x128xf32>
    %8 = arith.maximumf %6, %7 : vector<8x128xf32>
    %9 = arith.truncf %8 : vector<8x128xf32> to vector<8x128xbf16>
    %c0_6 = arith.constant 0 : index
    %c0_7 = arith.constant 0 : index
    %10 = vector.load %arg4[%c0_6, %c0_7] : memref<128x128xbf16, #tpu.memory_space<vmem>>, vector<128x128xbf16>
    %cst_8 = arith.constant dense<0.000000e+00> : vector<8x128xf32>
    %11 = tpu.matmul %9, %10, %cst_8 {dimension_numbers = #tpu.dot_dimension_numbers<[1], [0], [0], [1], [0, 0, 1, 1], [], []>} : vector<8x128xbf16>, vector<128x128xbf16>, vector<8x128xf32> -> vector<8x128xf32>
    %c0_9 = arith.constant 0 : index
    %c0_10 = arith.constant 0 : index
    %12 = vector.load %arg5[%c0_9, %c0_10] : memref<1x128xf32, #tpu.memory_space<vmem>>, vector<1x128xf32>
    %13 = vector.broadcast %12 : vector<1x128xf32> to vector<8x128xf32>
    %14 = arith.addf %11, %13 : vector<8x128xf32>
    %cst_11 = arith.constant 0.000000e+00 : f32
    %15 = vector.broadcast %cst_11 : f32 to vector<8x128xf32>
    %16 = arith.maximumf %14, %15 : vector<8x128xf32>
    %17 = arith.truncf %16 : vector<8x128xf32> to vector<8x128xbf16>
    %c0_12 = arith.constant 0 : index
    %c0_13 = arith.constant 0 : index
    %18 = vector.load %arg6[%c0_12, %c0_13] : memref<128x128xbf16, #tpu.memory_space<vmem>>, vector<128x128xbf16>
    %cst_14 = arith.constant dense<0.000000e+00> : vector<8x128xf32>
    %19 = tpu.matmul %17, %18, %cst_14 {dimension_numbers = #tpu.dot_dimension_numbers<[1], [0], [0], [1], [0, 0, 1, 1], [], []>} : vector<8x128xbf16>, vector<128x128xbf16>, vector<8x128xf32> -> vector<8x128xf32>
    %c0_15 = arith.constant 0 : index
    %c0_16 = arith.constant 0 : index
    %20 = vector.load %arg7[%c0_15, %c0_16] : memref<1x128xf32, #tpu.memory_space<vmem>>, vector<1x128xf32>
    %21 = vector.broadcast %20 : vector<1x128xf32> to vector<8x128xf32>
    %22 = arith.addf %19, %21 : vector<8x128xf32>
    %23 = vector.extract_strided_slice %22 {offsets = [0, 8], sizes = [8, 1], strides = [1, 1]} : vector<8x128xf32> to vector<8x1xf32>
    %c0_17 = arith.constant 0 : index
    %c0_18 = arith.constant 0 : index
    %24 = vector.load %arg8[%c0_17, %c0_18] : memref<8x1xf32, #tpu.memory_space<vmem>>, vector<8x1xf32>
    tpu.vector_store %arg8[%c0_17, %c0_18], %23 {strides = array<i32>} : memref<8x1xf32, #tpu.memory_space<vmem>>, vector<8x1xf32>,
    %25 = vector.extract_strided_slice %22 {offsets = [0, 0], sizes = [8, 8], strides = [1, 1]} : vector<8x128xf32> to vector<8x8xf32>
    %cst_19 = arith.constant dense<0xFF800000> : vector<8xf32>
    %26 = vector.multi_reduction <maximumf>, %25, %cst_19 [1] : vector<8x8xf32> to vector<8xf32>
    %27 = vector.shape_cast %26 : vector<8xf32> to vector<8x1xf32>
    %28 = vector.broadcast %27 : vector<8x1xf32> to vector<8x8xf32>
    %29 = arith.subf %25, %28 : vector<8x8xf32>
    %30 = math.exp %29 : vector<8x8xf32>
    %cst_20 = arith.constant dense<0.000000e+00> : vector<8xf32>
    %31 = vector.multi_reduction <add>, %30, %cst_20 [1] : vector<8x8xf32> to vector<8xf32>
    %32 = vector.shape_cast %31 : vector<8xf32> to vector<8x1xf32>
    %33 = vector.broadcast %32 : vector<8x1xf32> to vector<8x8xf32>
    %34 = arith.divf %30, %33 : vector<8x8xf32>
    %c0_21 = arith.constant 0 : index
    %c0_22 = arith.constant 0 : index
    %35 = vector.load %arg9[%c0_21, %c0_22] : memref<8x8xf32, #tpu.memory_space<vmem>>, vector<8x8xf32>
    tpu.vector_store %arg9[%c0_21, %c0_22], %34 {strides = array<i32>} : memref<8x8xf32, #tpu.memory_space<vmem>>, vector<8x8xf32>,
    return
  }
  func.func @transform_0(%arg0: i32) -> (i32, i32) {
    %c0_i32 = arith.constant 0 : i32
    %c0_i32_0 = arith.constant 0 : i32
    return %arg0, %c0_i32 : i32, i32
  }
  func.func @transform_1(%arg0: i32) -> (i32, i32) {
    %c0_i32 = arith.constant 0 : i32
    %c0_i32_0 = arith.constant 0 : i32
    %c0_i32_1 = arith.constant 0 : i32
    return %c0_i32, %c0_i32_0 : i32, i32
  }
  func.func @transform_2(%arg0: i32) -> (i32, i32) {
    %c0_i32 = arith.constant 0 : i32
    %c0_i32_0 = arith.constant 0 : i32
    %c0_i32_1 = arith.constant 0 : i32
    return %c0_i32, %c0_i32_0 : i32, i32
  }
  func.func @transform_3(%arg0: i32) -> (i32, i32) {
    %c0_i32 = arith.constant 0 : i32
    %c0_i32_0 = arith.constant 0 : i32
    %c0_i32_1 = arith.constant 0 : i32
    return %c0_i32, %c0_i32_0 : i32, i32
  }
  func.func @transform_4(%arg0: i32) -> (i32, i32) {
    %c0_i32 = arith.constant 0 : i32
    %c0_i32_0 = arith.constant 0 : i32
    %c0_i32_1 = arith.constant 0 : i32
    return %c0_i32, %c0_i32_0 : i32, i32
  }
  func.func @transform_5(%arg0: i32) -> (i32, i32) {
    %c0_i32 = arith.constant 0 : i32
    %c0_i32_0 = arith.constant 0 : i32
    %c0_i32_1 = arith.constant 0 : i32
    return %c0_i32, %c0_i32_0 : i32, i32
  }
  func.func @transform_6(%arg0: i32) -> (i32, i32) {
    %c0_i32 = arith.constant 0 : i32
    %c0_i32_0 = arith.constant 0 : i32
    %c0_i32_1 = arith.constant 0 : i32
    return %c0_i32, %c0_i32_0 : i32, i32
  }
  func.func @transform_7(%arg0: i32) -> (i32, i32) {
    %c0_i32 = arith.constant 0 : i32
    %c0_i32_0 = arith.constant 0 : i32
    return %arg0, %c0_i32 : i32, i32
  }
  func.func @transform_8(%arg0: i32) -> (i32, i32) {
    %c0_i32 = arith.constant 0 : i32
    %c0_i32_0 = arith.constant 0 : i32
    return %arg0, %c0_i32 : i32, i32
  }
}

</mosaic_0001>

<llo_original>
// kernel: tpu_custom_call.1
$region0: #{tpu_custom_call.1}
  #allocation0 [shape = 'u32[]', space=smem, size = 0x4, offset = 0x4, fixed_abs, tag = 'smem constant byte address 0x4 - core index']
  #allocation1 [shape = 'u32[144,128]{1,0:T(1,128)}', space=vmem, size = 0x12000, scoped, tag = 'internal scratch']
  %s0 = inlined_call_operand.hbm [shape: f32[8,112], index: 0, kind: input, shape index: {}]
  %s1 = inlined_call_operand.hbm [shape: bf16[112,128], index: 1, kind: input, shape index: {}]
  %s2 = inlined_call_operand.vmem [shape: f32[1,128], index: 2, kind: input, shape index: {}]
  %s3 = inlined_call_operand.hbm [shape: bf16[128,128], index: 3, kind: input, shape index: {}]
  %s4 = inlined_call_operand.vmem [shape: f32[1,128], index: 4, kind: input, shape index: {}]
  %s5 = inlined_call_operand.hbm [shape: bf16[128,128], index: 5, kind: input, shape index: {}]
  %s6 = inlined_call_operand.vmem [shape: f32[1,128], index: 6, kind: input, shape index: {}]
  %s7 = inlined_call_operand.vmem [shape: f32[8,1], index: 7, kind: output, shape index: {0}]
  %s8 = inlined_call_operand.hbm [shape: f32[8,8], index: 8, kind: output, shape index: {1}]
  %9 = xla_tuple %s7, %s8
  %s10 = sld [smem:[#allocation0]]
  $region62: #{tpu_custom_call.1} parent=0
    _
  %s12 = ssub.s32 1, %s10
  %s13 = scalar_select 0, %s12, %s10
  $region1: #{tpu_custom_call.1} parent=0
    #allocation2 [shape = 'u8[4096]{0}', space=vmem, size = 0x1000, scoped, tag = 'input window, operand 0, single buffered']
    #allocation3 [shape = 's32[1]{0}', space=sflag, size = 0x4, scoped, tag = 'scoped memory for tpu_custom_call.1']
    #allocation4 [shape = 's32[1]{0}', space=sflag, size = 0x4, scoped, tag = 'scoped memory for tpu_custom_call.1']
    #allocation5 [shape = 'u8[28672]{0}', space=vmem, size = 0x7000, scoped, tag = 'input window, operand 1, single buffered']
    #allocation6 [shape = 's32[1]{0}', space=sflag, size = 0x4, scoped, tag = 'scoped memory for tpu_custom_call.1']
    #allocation7 [shape = 'u8[32768]{0}', space=vmem, size = 0x8000, scoped, tag = 'input window, operand 3, single buffered']
    #allocation8 [shape = 'u8[32768]{0}', space=vmem, size = 0x8000, scoped, tag = 'input window, operand 5, single buffered']
    #allocation9 [shape = 's32[1]{0}', space=sflag, size = 0x4, scoped, tag = 'scoped memory for tpu_custom_call.1']
    #allocation10 [shape = 'u8[4096]{0}', space=vmem, size = 0x1000, scoped, tag = 'output window, operand 1, single buffered']
    %14 = vsyncpa [#allocation3], 0
    %15 = vsyncpa [#allocation6], 0
    %16 = vsyncpa [#allocation9], 0
    %17 = vsyncpa [#allocation4], 0
    // Predicated region
    $region2: #{tpu_custom_call.1} parent=1 // pred_check
      _
    $region3: #{tpu_custom_call.1} parent=1 // pred_check_branch
      %19 = sbr.rel (0) target = $region5
    $region4: #{tpu_custom_call.1} parent=1 // pred_region
      %s21 = ssub.s32 128, 128
      %22 = vsyncadd [#allocation3], %s21
      %s24 = sshll.u32 [#allocation2], 4
      %s25 = int_to_ptr.vmem [resolvable:$true] %s24
      %27 = dma.hbm_to_vmem [thread:$0]  %s0, 128, %s25, [#allocation3]
    $region5: #{tpu_custom_call.1} parent=1 // pred_fallthru
      _
    // Predicated region
    $region6: #{tpu_custom_call.1} parent=1 // pred_check
      _
    $region7: #{tpu_custom_call.1} parent=1 // pred_check_branch
      %29 = sbr.rel (0) target = $region9
    $region8: #{tpu_custom_call.1} parent=1 // pred_region
      %s31 = ssub.s32 896, 896
      %32 = vsyncadd [#allocation6], %s31
      %s33 = sshll.u32 [#allocation5], 4
      %s34 = int_to_ptr.vmem [resolvable:$true] %s33
      %39 = dma.hbm_to_vmem [thread:$0]  %s1, 896, %s34, [#allocation6], 64, 64, 4
    $region9: #{tpu_custom_call.1} parent=1 // pred_fallthru
      _
    // Predicated region
    $region10: #{tpu_custom_call.1} parent=1 // pred_check
      _
    $region11: #{tpu_custom_call.1} parent=1 // pred_check_branch
      %41 = sbr.rel (0) target = $region13
    $region12: #{tpu_custom_call.1} parent=1 // pred_region
      _
    $region13: #{tpu_custom_call.1} parent=1 // pred_fallthru
      _
    // Predicated region
    $region14: #{tpu_custom_call.1} parent=1 // pred_check
      _
    $region15: #{tpu_custom_call.1} parent=1 // pred_check_branch
      %43 = sbr.rel (0) target = $region17
    $region16: #{tpu_custom_call.1} parent=1 // pred_region
      %s45 = ssub.s32 1024, 1024
      %46 = vsyncadd [#allocation6], %s45
      %s47 = sshll.u32 [#allocation7], 4
      %s48 = int_to_ptr.vmem [resolvable:$true] %s47
      %53 = dma.hbm_to_vmem [thread:$0]  %s3, 1024, %s48, [#allocation6], 64, 64, 4
    $region17: #{tpu_custom_call.1} parent=1 // pred_fallthru
      _
    // Predicated region
    $region18: #{tpu_custom_call.1} parent=1 // pred_check
      _
    $region19: #{tpu_custom_call.1} parent=1 // pred_check_branch
      %55 = sbr.rel (0) target = $region21
    $region20: #{tpu_custom_call.1} parent=1 // pred_region
      _
    $region21: #{tpu_custom_call.1} parent=1 // pred_fallthru
      _
    // Predicated region
    $region22: #{tpu_custom_call.1} parent=1 // pred_check
      _
    $region23: #{tpu_custom_call.1} parent=1 // pred_check_branch
      %57 = sbr.rel (0) target = $region25
    $region24: #{tpu_custom_call.1} parent=1 // pred_region
      %s59 = ssub.s32 1024, 1024
      %60 = vsyncadd [#allocation9], %s59
      %s61 = sshll.u32 [#allocation8], 4
      %s62 = int_to_ptr.vmem [resolvable:$true] %s61
      %67 = dma.hbm_to_vmem [thread:$0]  %s5, 1024, %s62, [#allocation9], 64, 64, 4
    $region25: #{tpu_custom_call.1} parent=1 // pred_fallthru
      _
    // Predicated region
    $region26: #{tpu_custom_call.1} parent=1 // pred_check
      _
    $region27: #{tpu_custom_call.1} parent=1 // pred_check_branch
      %69 = sbr.rel (0) target = $region29
    $region28: #{tpu_custom_call.1} parent=1 // pred_region
      _
    $region29: #{tpu_custom_call.1} parent=1 // pred_fallthru
      _
    // Predicated region
    $region30: #{tpu_custom_call.1} parent=1 // pred_check
      _
    $region31: #{tpu_custom_call.1} parent=1 // pred_check_branch
      %71 = sbr.rel (0) target = $region33
    $region32: #{tpu_custom_call.1} parent=1 // pred_region
      %72 = dma.done [#allocation3], 128
    $region33: #{tpu_custom_call.1} parent=1 // pred_fallthru
      _
    // Predicated region
    $region34: #{tpu_custom_call.1} parent=1 // pred_check
      _
    $region35: #{tpu_custom_call.1} parent=1 // pred_check_branch
      %74 = sbr.rel (0) target = $region37
    $region36: #{tpu_custom_call.1} parent=1 // pred_region
      %75 = dma.done [#allocation6], 896
    $region37: #{tpu_custom_call.1} parent=1 // pred_fallthru
      _
    // Predicated region
    $region38: #{tpu_custom_call.1} parent=1 // pred_check
      _
    $region39: #{tpu_custom_call.1} parent=1 // pred_check_branch
      %77 = sbr.rel (0) target = $region41
    $region40: #{tpu_custom_call.1} parent=1 // pred_region
      %78 = dma.done [#allocation6], 1024
    $region41: #{tpu_custom_call.1} parent=1 // pred_fallthru
      _
    // Predicated region
    $region42: #{tpu_custom_call.1} parent=1 // pred_check
      _
    $region43: #{tpu_custom_call.1} parent=1 // pred_check_branch
      %80 = sbr.rel (0) target = $region45
    $region44: #{tpu_custom_call.1} parent=1 // pred_region
      %81 = dma.done [#allocation9], 1024
    $region45: #{tpu_custom_call.1} parent=1 // pred_fallthru
      _
    %v83 = vld [vmem:[#allocation2] sm:$0xff]
    %v84 = vpack.c.bf16 %v83, %v83
    %v85 = vld [vmem:[#allocation5] sm:$0xf]
    %v86 = vld [vmem:[#allocation5 + $0x4] sm:$0xf]
    %v87 = vld [vmem:[#allocation5 + $0x8] sm:$0xf]
    %v88 = vld [vmem:[#allocation5 + $0xc] sm:$0xf]
    %v89 = vld [vmem:[#allocation5 + $0x10] sm:$0xf]
    %v90 = vld [vmem:[#allocation5 + $0x14] sm:$0xf]
    %v91 = vld [vmem:[#allocation5 + $0x18] sm:$0xf]
    %v92 = vld [vmem:[#allocation5 + $0x1c] sm:$0xf]
    %v93 = vld [vmem:[#allocation5 + $0x20] sm:$0xf]
    %v94 = vld [vmem:[#allocation5 + $0x24] sm:$0xf]
    %v95 = vld [vmem:[#allocation5 + $0x28] sm:$0xf]
    %v96 = vld [vmem:[#allocation5 + $0x2c] sm:$0xf]
    %v97 = vld [vmem:[#allocation5 + $0x30] sm:$0xf]
    %v98 = vld [vmem:[#allocation5 + $0x34] sm:$0xf]
    %v99 = vld [vmem:[%s2] sm:$0x1]
    %v101 = vlaneseq
    %v102 = vshrl.u32 %v101, 7
    %v103 = vsub.s32 0, %v102
    %v104 = vrot.slane %v99, %v103
    %v120 = vunpack.c.l.b16 %v85
    %v121 = vunpack.c.l.b16 %v86
    %v122 = vunpack.c.l.b16 %v87
    %v123 = vunpack.c.l.b16 %v88
    %v124 = vunpack.c.l.b16 %v89
    %v125 = vunpack.c.l.b16 %v90
    %v126 = vunpack.c.l.b16 %v91
    %v127 = vunpack.c.l.b16 %v92
    %v128 = vunpack.c.l.b16 %v93
    %v129 = vunpack.c.l.b16 %v94
    %v130 = vunpack.c.l.b16 %v95
    %v131 = vunpack.c.l.b16 %v96
    %v132 = vunpack.c.l.b16 %v97
    %v133 = vunpack.c.l.b16 %v98
    %v134 = vpack.c.b16 %v121, %v120
    %v135 = vpack.c.b16 %v123, %v122
    %v136 = vpack.c.b16 %v125, %v124
    %v137 = vpack.c.b16 %v127, %v126
    %v138 = vpack.c.b16 %v129, %v128
    %v139 = vpack.c.b16 %v131, %v130
    %v140 = vpack.c.b16 %v133, %v132
    %vm148 = vcmask 916480
    %v150 = vsel %vm148, %v84, 0
    %152 = vmatprep.subr.bf16.mxu0 0
    %153 = vmatpush1.bf16.msra.mxu0 %v134
    %154 = vmatprep.subr.bf16.mxu0 0
    %155 = vmatpush1.bf16.msra.mxu0 %v135
    %156 = vmatprep.subr.bf16.mxu0 0
    %157 = vmatpush1.bf16.msra.mxu0 %v136
    %158 = vmatprep.subr.bf16.mxu0 0
    %159 = vmatpush1.bf16.msra.mxu0 %v137
    %160 = vmatprep.subr.bf16.mxu0 0
    %161 = vmatpush1.bf16.msra.mxu0 %v138
    %162 = vmatprep.subr.bf16.mxu0 0
    %163 = vmatpush1.bf16.msra.mxu0 %v139
    %164 = vmatprep.subr.bf16.mxu0 0
    %165 = vmatpush1.bf16.msra.mxu0 %v140
    %166 = vmatprep.subr.bf16.mxu0 0
    %167 = vmatpush1.bf16.msra.mxu0 0
    %168 = vmatprep.subr.bf16.mxu0 0
    %169 = vmatpush1.bf16.msra.mxu0 0
    %170 = vmatprep.subr.bf16.mxu0 0
    %171 = vmatpush1.bf16.msra.mxu0 0
    %172 = vmatprep.subr.bf16.mxu0 0
    %173 = vmatpush1.bf16.msra.mxu0 0
    %174 = vmatprep.subr.bf16.mxu0 0
    %175 = vmatpush1.bf16.msra.mxu0 0
    %176 = vmatprep.subr.bf16.mxu0 0
    %177 = vmatpush1.bf16.msra.mxu0 0
    %178 = vmatprep.subr.bf16.mxu0 0
    %179 = vmatpush1.bf16.msra.mxu0 0
    %180 = vmatprep.subr.bf16.mxu0 0
    %181 = vmatpush1.bf16.msra.mxu0 0
    %182 = vmatprep.subr.bf16.mxu0 0
    %183 = vmatpush1.bf16.msra.mxu0 0
    %184 = vmatprep.mubr.bf16.mxu0 0
    %185 = vmatmul.mubr.bf16.gmra.mrb[0].mxu0 %v150
    %v186 = vpop.f32.mrb[0].mxu0
    %v187 = vadd.f32 %v104, %v186
    %v188 = vpop.f32.mrb[0].mxu0
    %v189 = vpop.f32.mrb[0].mxu0
    %v190 = vpop.f32.mrb[0].mxu0
    %191 = vdwg.mxu0
    %v192 = vmax.f32 %v187, 0.0
    %v193 = vpack.c.bf16 %v192, %v192
    %v194 = vld [vmem:[#allocation7] sm:$0xf]
    %v195 = vld [vmem:[#allocation7 + $0x4] sm:$0xf]
    %v196 = vld [vmem:[#allocation7 + $0x8] sm:$0xf]
    %v197 = vld [vmem:[#allocation7 + $0xc] sm:$0xf]
    %v198 = vld [vmem:[#allocation7 + $0x10] sm:$0xf]
    %v199 = vld [vmem:[#allocation7 + $0x14] sm:$0xf]
    %v200 = vld [vmem:[#allocation7 + $0x18] sm:$0xf]
    %v201 = vld [vmem:[#allocation7 + $0x1c] sm:$0xf]
    %v202 = vld [vmem:[#allocation7 + $0x20] sm:$0xf]
    %v203 = vld [vmem:[#allocation7 + $0x24] sm:$0xf]
    %v204 = vld [vmem:[#allocation7 + $0x28] sm:$0xf]
    %v205 = vld [vmem:[#allocation7 + $0x2c] sm:$0xf]
    %v206 = vld [vmem:[#allocation7 + $0x30] sm:$0xf]
    %v207 = vld [vmem:[#allocation7 + $0x34] sm:$0xf]
    %v208 = vld [vmem:[#allocation7 + $0x38] sm:$0xf]
    %v209 = vld [vmem:[#allocation7 + $0x3c] sm:$0xf]
    %v210 = vld [vmem:[%s4] sm:$0x1]
    %v212 = vlaneseq
    %v213 = vshrl.u32 %v212, 7
    %v214 = vsub.s32 0, %v213
    %v215 = vrot.slane %v210, %v214
    %v233 = vunpack.c.l.b16 %v194
    %v234 = vunpack.c.l.b16 %v195
    %v235 = vunpack.c.l.b16 %v196
    %v236 = vunpack.c.l.b16 %v197
    %v237 = vunpack.c.l.b16 %v198
    %v238 = vunpack.c.l.b16 %v199
    %v239 = vunpack.c.l.b16 %v200
    %v240 = vunpack.c.l.b16 %v201
    %v241 = vunpack.c.l.b16 %v202
    %v242 = vunpack.c.l.b16 %v203
    %v243 = vunpack.c.l.b16 %v204
    %v244 = vunpack.c.l.b16 %v205
    %v245 = vunpack.c.l.b16 %v206
    %v246 = vunpack.c.l.b16 %v207
    %v247 = vunpack.c.l.b16 %v208
    %v248 = vunpack.c.l.b16 %v209
    %v249 = vpack.c.b16 %v234, %v233
    %v250 = vpack.c.b16 %v236, %v235
    %v251 = vpack.c.b16 %v238, %v237
    %v252 = vpack.c.b16 %v240, %v239
    %v253 = vpack.c.b16 %v242, %v241
    %v254 = vpack.c.b16 %v244, %v243
    %v255 = vpack.c.b16 %v246, %v245
    %v256 = vpack.c.b16 %v248, %v247
    %265 = vmatprep.subr.bf16.mxu0 0
    %266 = vmatpush1.bf16.msra.mxu0 %v249
    %267 = vmatprep.subr.bf16.mxu0 0
    %268 = vmatpush1.bf16.msra.mxu0 %v250
    %269 = vmatprep.subr.bf16.mxu0 0
    %270 = vmatpush1.bf16.msra.mxu0 %v251
    %271 = vmatprep.subr.bf16.mxu0 0
    %272 = vmatpush1.bf16.msra.mxu0 %v252
    %273 = vmatprep.subr.bf16.mxu0 0
    %274 = vmatpush1.bf16.msra.mxu0 %v253
    %275 = vmatprep.subr.bf16.mxu0 0
    %276 = vmatpush1.bf16.msra.mxu0 %v254
    %277 = vmatprep.subr.bf16.mxu0 0
    %278 = vmatpush1.bf16.msra.mxu0 %v255
    %279 = vmatprep.subr.bf16.mxu0 0
    %280 = vmatpush1.bf16.msra.mxu0 %v256
    %281 = vmatprep.subr.bf16.mxu0 0
    %282 = vmatpush1.bf16.msra.mxu0 0
    %283 = vmatprep.subr.bf16.mxu0 0
    %284 = vmatpush1.bf16.msra.mxu0 0
    %285 = vmatprep.subr.bf16.mxu0 0
    %286 = vmatpush1.bf16.msra.mxu0 0
    %287 = vmatprep.subr.bf16.mxu0 0
    %288 = vmatpush1.bf16.msra.mxu0 0
    %289 = vmatprep.subr.bf16.mxu0 0
    %290 = vmatpush1.bf16.msra.mxu0 0
    %291 = vmatprep.subr.bf16.mxu0 0
    %292 = vmatpush1.bf16.msra.mxu0 0
    %293 = vmatprep.subr.bf16.mxu0 0
    %294 = vmatpush1.bf16.msra.mxu0 0
    %295 = vmatprep.subr.bf16.mxu0 0
    %296 = vmatpush1.bf16.msra.mxu0 0
    %297 = vmatprep.mubr.bf16.mxu0 0
    %298 = vmatmul.mubr.bf16.gmra.mrb[0].mxu0 %v193
    %v299 = vpop.f32.mrb[0].mxu0
    %v300 = vadd.f32 %v215, %v299
    %v301 = vpop.f32.mrb[0].mxu0
    %v302 = vpop.f32.mrb[0].mxu0
    %v303 = vpop.f32.mrb[0].mxu0
    %304 = vdwg.mxu0
    %v305 = vmax.f32 %v300, 0.0
    %v306 = vpack.c.bf16 %v305, %v305
    %v307 = vld [vmem:[#allocation8] sm:$0xf]
    %v308 = vld [vmem:[#allocation8 + $0x4] sm:$0xf]
    %v309 = vld [vmem:[#allocation8 + $0x8] sm:$0xf]
    %v310 = vld [vmem:[#allocation8 + $0xc] sm:$0xf]
    %v311 = vld [vmem:[#allocation8 + $0x10] sm:$0xf]
    %v312 = vld [vmem:[#allocation8 + $0x14] sm:$0xf]
    %v313 = vld [vmem:[#allocation8 + $0x18] sm:$0xf]
    %v314 = vld [vmem:[#allocation8 + $0x1c] sm:$0xf]
    %v315 = vld [vmem:[#allocation8 + $0x20] sm:$0xf]
    %v316 = vld [vmem:[#allocation8 + $0x24] sm:$0xf]
    %v317 = vld [vmem:[#allocation8 + $0x28] sm:$0xf]
    %v318 = vld [vmem:[#allocation8 + $0x2c] sm:$0xf]
    %v319 = vld [vmem:[#allocation8 + $0x30] sm:$0xf]
    %v320 = vld [vmem:[#allocation8 + $0x34] sm:$0xf]
    %v321 = vld [vmem:[#allocation8 + $0x38] sm:$0xf]
    %v322 = vld [vmem:[#allocation8 + $0x3c] sm:$0xf]
    %v323 = vld [vmem:[%s6] sm:$0x1]
    %v325 = vlaneseq
    %v326 = vshrl.u32 %v325, 7
    %v327 = vsub.s32 0, %v326
    %v328 = vrot.slane %v323, %v327
    %v346 = vunpack.c.l.b16 %v307
    %v347 = vunpack.c.l.b16 %v308
    %v348 = vunpack.c.l.b16 %v309
    %v349 = vunpack.c.l.b16 %v310
    %v350 = vunpack.c.l.b16 %v311
    %v351 = vunpack.c.l.b16 %v312
    %v352 = vunpack.c.l.b16 %v313
    %v353 = vunpack.c.l.b16 %v314
    %v354 = vunpack.c.l.b16 %v315
    %v355 = vunpack.c.l.b16 %v316
    %v356 = vunpack.c.l.b16 %v317
    %v357 = vunpack.c.l.b16 %v318
    %v358 = vunpack.c.l.b16 %v319
    %v359 = vunpack.c.l.b16 %v320
    %v360 = vunpack.c.l.b16 %v321
    %v361 = vunpack.c.l.b16 %v322
    %v362 = vpack.c.b16 %v347, %v346
    %v363 = vpack.c.b16 %v349, %v348
    %v364 = vpack.c.b16 %v351, %v350
    %v365 = vpack.c.b16 %v353, %v352
    %v366 = vpack.c.b16 %v355, %v354
    %v367 = vpack.c.b16 %v357, %v356
    %v368 = vpack.c.b16 %v359, %v358
    %v369 = vpack.c.b16 %v361, %v360
    %378 = vmatprep.subr.bf16.mxu0 0
    %379 = vmatpush1.bf16.msra.mxu0 %v362
    %380 = vmatprep.subr.bf16.mxu0 0
    %381 = vmatpush1.bf16.msra.mxu0 %v363
    %382 = vmatprep.subr.bf16.mxu0 0
    %383 = vmatpush1.bf16.msra.mxu0 %v364
    %384 = vmatprep.subr.bf16.mxu0 0
    %385 = vmatpush1.bf16.msra.mxu0 %v365
    %386 = vmatprep.subr.bf16.mxu0 0
    %387 = vmatpush1.bf16.msra.mxu0 %v366
    %388 = vmatprep.subr.bf16.mxu0 0
    %389 = vmatpush1.bf16.msra.mxu0 %v367
    %390 = vmatprep.subr.bf16.mxu0 0
    %391 = vmatpush1.bf16.msra.mxu0 %v368
    %392 = vmatprep.subr.bf16.mxu0 0
    %393 = vmatpush1.bf16.msra.mxu0 %v369
    %394 = vmatprep.subr.bf16.mxu0 0
    %395 = vmatpush1.bf16.msra.mxu0 0
    %396 = vmatprep.subr.bf16.mxu0 0
    %397 = vmatpush1.bf16.msra.mxu0 0
    %398 = vmatprep.subr.bf16.mxu0 0
    %399 = vmatpush1.bf16.msra.mxu0 0
    %400 = vmatprep.subr.bf16.mxu0 0
    %401 = vmatpush1.bf16.msra.mxu0 0
    %402 = vmatprep.subr.bf16.mxu0 0
    %403 = vmatpush1.bf16.msra.mxu0 0
    %404 = vmatprep.subr.bf16.mxu0 0
    %405 = vmatpush1.bf16.msra.mxu0 0
    %406 = vmatprep.subr.bf16.mxu0 0
    %407 = vmatpush1.bf16.msra.mxu0 0
    %408 = vmatprep.subr.bf16.mxu0 0
    %409 = vmatpush1.bf16.msra.mxu0 0
    %410 = vmatprep.mubr.bf16.mxu0 0
    %411 = vmatmul.mubr.bf16.gmra.mrb[0].mxu0 %v306
    %v412 = vpop.f32.mrb[0].mxu0
    %v413 = vadd.f32 %v328, %v412
    %v414 = vpop.f32.mrb[0].mxu0
    %v415 = vpop.f32.mrb[0].mxu0
    %v416 = vpop.f32.mrb[0].mxu0
    %417 = vdwg.mxu0
    %419 = vrot.lane.b32.xlu0 %v413, 120
    %v420 = vpop.permute.xlu0 %419
    %vm422 = vcmask 7168
    %423 = vst.msk [vmem:[%s7] sm:$0xff] %vm422, %v420
    %vm424 = vcmask 64512
    %v425 = vsel %vm424, %v413, -inf
    %426 = vmax.xlane.f32.xlu0 %v425
    %v427 = vpop.xlane.xlu0 %426
    %v428 = vsub.f32 %v413, %v427
    %v429 = vmul.f32 %v428, 1.442695
    %v430 = vpow.pop %v429
    %v431 = vsel %vm424, %v430, 0.0
    %432 = vadd.xlane.f32.xlu0 %v431
    %v433 = vpop.xlane.xlu0 %432
    %v434 = vrcp.pop %v433
    %v435 = vmul.f32 %v430, %v434
    %436 = vst.msk [vmem:[#allocation10] sm:$0xff] %vm424, %v435
    // Predicated region
    $region46: #{tpu_custom_call.1} parent=1 // pred_check
      _
    $region47: #{tpu_custom_call.1} parent=1 // pred_check_branch
      %438 = sbr.rel (0) target = $region49
    $region48: #{tpu_custom_call.1} parent=1 // pred_region
      _
    $region49: #{tpu_custom_call.1} parent=1 // pred_fallthru
      _
    // Predicated region
    $region50: #{tpu_custom_call.1} parent=1 // pred_check
      _
    $region51: #{tpu_custom_call.1} parent=1 // pred_check_branch
      %440 = sbr.rel (0) target = $region53
    $region52: #{tpu_custom_call.1} parent=1 // pred_region
      %s442 = ssub.s32 128, 128
      %443 = vsyncadd [#allocation4], %s442
      %s445 = sshll.u32 [#allocation10], 4
      %s446 = int_to_ptr.vmem [resolvable:$true] %s445
      %448 = dma.vmem_to_hbm [thread:$0]  %s446, 128, %s8, [#allocation4]
    $region53: #{tpu_custom_call.1} parent=1 // pred_fallthru
      _
    // Predicated region
    $region54: #{tpu_custom_call.1} parent=1 // pred_check
      _
    $region55: #{tpu_custom_call.1} parent=1 // pred_check_branch
      %450 = sbr.rel (0) target = $region57
    $region56: #{tpu_custom_call.1} parent=1 // pred_region
      _
    $region57: #{tpu_custom_call.1} parent=1 // pred_fallthru
      _
    // Predicated region
    $region58: #{tpu_custom_call.1} parent=1 // pred_check
      _
    $region59: #{tpu_custom_call.1} parent=1 // pred_check_branch
      %452 = sbr.rel (0) target = $region61
    $region60: #{tpu_custom_call.1} parent=1 // pred_region
      %453 = dma.done [#allocation4], 128
    $region61: #{tpu_custom_call.1} parent=1 // pred_fallthru
      _
    %454 = vsyncpa [#allocation3], 1
    %455 = vsyncpa [#allocation6], 1
    %456 = vsyncpa [#allocation9], 1
    %457 = vsyncpa [#allocation4], 1

</llo_original>
